<compile_context>
chip_gen: v5e
topology: v5e:2x2
jax: 0.10.0
libtpu: 0.0.40
codegen_flags: <defaults>
</compile_context>

<pallas_src>
import functools

import jax
import jax.numpy as jnp
from jax import lax
from jax.experimental import pallas as pl
from jax.experimental.pallas import tpu as pltpu


def _pair(v):
    return (int(v), int(v)) if isinstance(v, int) else (int(v[0]), int(v[1]))


def _dwsep_kernel(x_ref, dww_ref, dwb_ref, pww_ref, pwb_ref, o_ref, *,
                  kh, kw, s_h, s_w, d_h, d_w, th, wf, wo, cin, cout):
    """Fused depthwise conv + bias + ReLU + pointwise 1x1 + bias + ReLU.

    Lane-fused layouts:
      x_ref  : (Hp, Wp*Cin)     padded input image (W and C fused on lanes)
      dww_ref: (kh*kw, Wf*Cin)  depthwise tap weights, tiled along W
      dwb_ref: (1, Wf*Cin)      depthwise bias, tiled along W
      pww_ref: (Cin, Cout)      pointwise weights
      pwb_ref: (1, Cout)        pointwise bias
      o_ref  : (TH, Wo*Cout)    output row tile (lane-dense store)
    """
    r = pl.program_id(1)
    th_in = (th - 1) * s_h + d_h * (kh - 1) + 1
    row0 = pl.multiple_of(r * th * s_h, 8)
    xt = x_ref[pl.ds(row0, th_in), :].astype(jnp.float32)       # (th_in, Wp*Cin)

    # ---- depthwise conv on the VPU (W*Cin fused on the lane axis) ----------
    acc = jnp.zeros((th, wf * cin), jnp.float32)
    for i in range(kh):
        r_lo = i * d_h
        for j in range(kw):
            c_lo = j * d_w * cin
            patch = xt[r_lo:r_lo + (th - 1) * s_h + 1:s_h,
                       c_lo:c_lo + wf * cin]
            acc = acc + patch * dww_ref[i * kw + j, :].astype(jnp.float32)
    acc = jnp.maximum(acc + dwb_ref[0, :].astype(jnp.float32), 0.0)

    # W-stride applied once (never inside the tap loop); no-op for stride 1.
    dw3 = acc.reshape(th, wf, cin)
    if s_w > 1:
        dw3 = dw3[:, ::s_w, :]                                   # (th, wo, cin)

    # ---- pointwise 1x1 conv -------------------------------------------------
    if cin >= 128 and cout >= 128:
        # Big-channel configs: MXU with bf16 inputs / f32 accumulation.
        pw = jnp.dot(dw3.reshape(th * wo, cin).astype(jnp.bfloat16),
                     pww_ref[...].astype(jnp.bfloat16),
                     preferred_element_type=jnp.float32).reshape(th, wo, cout)
    else:
        # Tiny channels: Cin broadcast-FMA passes on the VPU
        # (a (TH*Wo,4)x(4,8) matmul would use <1% of the MXU).
        pw = jnp.zeros((th, wo, cout), jnp.float32)
        for ci in range(cin):
            pw = pw + dw3[:, :, ci:ci + 1] * pww_ref[ci, :].astype(jnp.float32)
    pw = jnp.maximum(pw + pwb_ref[0, :].astype(jnp.float32), 0.0)

    # Lane-dense store: last output dim is Wo*Cout.
    o_ref[...] = pw.reshape(th, wo * cout).astype(o_ref.dtype)


def _choose_row_tile(ho, wo, cout, itemsize, row_tile=None):
    if row_tile is not None:
        assert ho % row_tile == 0, "row_tile must divide Ho"
        return int(row_tile)
    budget = 2 << 20  # per output block (double-buffered by Pallas)
    cands = [t for t in range(8, ho + 1, 8)
             if ho % t == 0 and t * wo * cout * itemsize <= budget]
    return max(cands) if cands else ho


def depthwise_separable_conv(x_nchw, dw_w, dw_b, pw_w, pw_b, *,
                             stride=1, padding=0, dilation=1, row_tile=None):
    """x_nchw: (N, Cin, H, W).  dw_w: (Cin, 1, kh, kw).  pw_w: (Cout, Cin, 1, 1)."""
    n, cin, h, w = x_nchw.shape
    kh, kw = int(dw_w.shape[2]), int(dw_w.shape[3])
    cout = int(pw_w.shape[0])
    s_h, s_w = _pair(stride)
    p_h, p_w = _pair(padding)
    d_h, d_w = _pair(dilation)

    hp, wp = h + 2 * p_h, w + 2 * p_w
    ho = (hp - d_h * (kh - 1) - 1) // s_h + 1
    wo = (wp - d_w * (kw - 1) - 1) // s_w + 1
    wf = wp - d_w * (kw - 1)            # stride-1 ("full") W output count

    th = _choose_row_tile(ho, wo, cout, x_nchw.dtype.itemsize, row_tile)
    n_row_tiles = ho // th

    # --- glue: NCHW -> NHWC, zero pad, fuse (W, C) into the lane axis -------
    # TODO(synk): for an NHWC end-to-end model this transpose/pad glue (two
    # extra HBM passes) should be removed / replaced by in-kernel edge masking.
    x = jnp.transpose(x_nchw, (0, 2, 3, 1))
    x = jnp.pad(x, ((0, 0), (p_h, p_h), (p_w, p_w), (0, 0)))
    x = x.reshape(n, hp, wp * cin)

    taps = jnp.transpose(dw_w[:, 0, :, :], (1, 2, 0)).reshape(kh * kw, cin)
    dww_f = jnp.tile(taps, (1, wf))                          # (kh*kw, Wf*Cin)
    dwb_f = jnp.tile(dw_b.reshape(1, cin), (1, wf))          # (1, Wf*Cin)
    pww = jnp.transpose(pw_w[:, :, 0, 0], (1, 0))            # (Cin, Cout)
    pwb = pw_b.reshape(1, cout)

    kernel = functools.partial(_dwsep_kernel, kh=kh, kw=kw, s_h=s_h, s_w=s_w,
                               d_h=d_h, d_w=d_w, th=th, wf=wf, wo=wo,
                               cin=cin, cout=cout)

    # Rough VMEM need (double-buffered I/O blocks + weights + live values).
    bpe = x.dtype.itemsize
    est = (2 * (hp * wp * cin * bpe + th * wo * cout * bpe)
           + (kh * kw + 1) * wf * cin * 4 + (cin + 1) * cout * 4
           + (th * wf * cin + th * wo * cout) * 4)
    vmem_limit = int(min(max(4 * est, 16 << 20), 48 << 20))

    # TODO(synk): for very large feature maps, switch the input BlockSpec to a
    # halo-overlapped row tile (pl.Element on H) instead of one whole-image
    # block revisited across the row-tile axis.
    out_f = pl.pallas_call(
        kernel,
        out_shape=jax.ShapeDtypeStruct((n, ho, wo * cout), x_nchw.dtype),
        grid_spec=pltpu.PrefetchScalarGridSpec(
            num_scalar_prefetch=0,
            grid=(n, n_row_tiles),
            in_specs=[
                pl.BlockSpec((None, hp, wp * cin), lambda b, r: (b, 0, 0)),
                pl.BlockSpec((kh * kw, wf * cin), lambda b, r: (0, 0)),
                pl.BlockSpec((1, wf * cin), lambda b, r: (0, 0)),
                pl.BlockSpec((cin, cout), lambda b, r: (0, 0)),
                pl.BlockSpec((1, cout), lambda b, r: (0, 0)),
            ],
            out_specs=pl.BlockSpec((None, th, wo * cout),
                                   lambda b, r: (b, r, 0)),
        ),
        compiler_params=pltpu.CompilerParams(
            dimension_semantics=("parallel", "parallel"),
            vmem_limit_bytes=vmem_limit),
    )(x, dww_f, dwb_f, pww, pwb)

    out = out_f.reshape(n, ho, wo, cout)
    return jnp.transpose(out, (0, 3, 1, 2))                  # back to NCHW


def _reference(x_nchw, dw_w, dw_b, pw_w, pw_b, *, stride, padding, dilation):
    cin = x_nchw.shape[1]
    dw = lax.conv_general_dilated(
        x_nchw, dw_w, window_strides=(stride, stride),
        padding=[(padding, padding), (padding, padding)],
        rhs_dilation=(dilation, dilation),
        dimension_numbers=("NCHW", "OIHW", "NCHW"),
        feature_group_count=cin)
    dw = jax.nn.relu(dw + dw_b[None, :, None, None])
    pw = lax.conv_general_dilated(
        dw, pw_w, window_strides=(1, 1), padding=[(0, 0), (0, 0)],
        dimension_numbers=("NCHW", "OIHW", "NCHW"))
    return jax.nn.relu(pw + pw_b[None, :, None, None])


if __name__ == "__main__":
    # Module config: in_channels=4, out_channels=8, kernel_size=3,
    # stride=1, padding=1 (norm_cfg=None -> conv bias=True, act=ReLU).
    N, CIN, H, W = 2, 4, 16, 16
    COUT, K = 8, 3
    STRIDE, PADDING, DILATION = 1, 1, 1

    key = jax.random.PRNGKey(0)
    kx, k1, k2, k3, k4 = jax.random.split(key, 5)

    x = jax.random.normal(kx, (N, CIN, H, W), dtype=jnp.float32)
    dw_w = jax.random.normal(k1, (CIN, 1, K, K), dtype=jnp.float32) * 0.3
    dw_b = jax.random.normal(k2, (CIN,), dtype=jnp.float32) * 0.1
    pw_w = jax.random.normal(k3, (COUT, CIN, 1, 1), dtype=jnp.float32) * 0.3
    pw_b = jax.random.normal(k4, (COUT,), dtype=jnp.float32) * 0.1

    ref = _reference(x, dw_w, dw_b, pw_w, pw_b,
                     stride=STRIDE, padding=PADDING, dilation=DILATION)

    # Row-tiled path (grid = (N, Ho/8)) and single-tile path (TH = Ho).
    out_tiled = jax.block_until_ready(
        depthwise_separable_conv(x, dw_w, dw_b, pw_w, pw_b,
                                 stride=STRIDE, padding=PADDING,
                                 dilation=DILATION, row_tile=8))
    out_auto = jax.block_until_ready(
        depthwise_separable_conv(x, dw_w, dw_b, pw_w, pw_b,
                                 stride=STRIDE, padding=PADDING,
                                 dilation=DILATION))

    assert out_tiled.shape == (N, COUT, H, W), out_tiled.shape
    for out in (out_tiled, out_auto):
        err = float(jnp.max(jnp.abs(out - ref)))
        assert jnp.allclose(out, ref, atol=1e-4, rtol=1e-4), err

    print("KERNEL_OK")
</pallas_src>

<mosaic_0001>
module attributes {stable_mosaic.version = 11 : i64} {
  func.func @_dwsep_kernel(%arg0: i32, %arg1: i32, %arg2: memref<1x18x72xf32, #tpu.memory_space<vmem>>, %arg3: memref<9x64xf32, #tpu.memory_space<vmem>>, %arg4: memref<1x64xf32, #tpu.memory_space<vmem>>, %arg5: memref<4x8xf32, #tpu.memory_space<vmem>>, %arg6: memref<1x8xf32, #tpu.memory_space<vmem>>, %arg7: memref<1x8x128xf32, #tpu.memory_space<vmem>>) attributes {dimension_semantics = [#tpu.dimension_semantics<parallel>, #tpu.dimension_semantics<parallel>], iteration_bounds = array<i64: 2, 2>, scalar_prefetch = 0 : i64, scratch_operands = 0 : i64, tpu.core_type = #tpu.core_type<tc>, window_params = [{transform_indices = @transform_0, window_bounds = array<i64: 1, 18, 72>}, {pipeline_mode = #tpu.pipeline_mode<synchronous>, transform_indices = @transform_1, window_bounds = array<i64: 9, 64>}, {pipeline_mode = #tpu.pipeline_mode<synchronous>, transform_indices = @transform_2, window_bounds = array<i64: 1, 64>}, {pipeline_mode = #tpu.pipeline_mode<synchronous>, transform_indices = @transform_3, window_bounds = array<i64: 4, 8>}, {pipeline_mode = #tpu.pipeline_mode<synchronous>, transform_indices = @transform_4, window_bounds = array<i64: 1, 8>}, {transform_indices = @transform_5, window_bounds = array<i64: 1, 8, 128>}]} {
    %c8_i32 = arith.constant 8 : i32
    %0 = arith.muli %arg1, %c8_i32 : i32
    %c1_i32 = arith.constant 1 : i32
    %1 = arith.muli %0, %c1_i32 : i32
    %2 = tpu.assume_multiple %1, 8 : i32
    %c0 = arith.constant 0 : index
    %3 = arith.index_cast %2 : i32 to index
    %c0_0 = arith.constant 0 : index
    %4 = vector.load %arg2[%c0, %3, %c0_0] : memref<1x18x72xf32, #tpu.memory_space<vmem>>, vector<1x10x72xf32>
    %5 = vector.shape_cast %4 : vector<1x10x72xf32> to vector<10x72xf32>
    %cst = arith.constant 0.000000e+00 : f32
    %6 = vector.broadcast %cst : f32 to vector<8x64xf32>
    %7 = vector.extract_strided_slice %5 {offsets = [0, 0], sizes = [8, 64], strides = [1, 1]} : vector<10x72xf32> to vector<8x64xf32>
    %c0_1 = arith.constant 0 : index
    %c0_2 = arith.constant 0 : index
    %8 = vector.load %arg3[%c0_1, %c0_2] : memref<9x64xf32, #tpu.memory_space<vmem>>, vector<1x64xf32>
    %9 = vector.shape_cast %8 : vector<1x64xf32> to vector<64xf32>
    %10 = vector.shape_cast %9 : vector<64xf32> to vector<1x64xf32>
    %11 = vector.broadcast %10 : vector<1x64xf32> to vector<8x64xf32>
    %12 = arith.mulf %7, %11 : vector<8x64xf32>
    %13 = arith.addf %6, %12 : vector<8x64xf32>
    %14 = vector.extract_strided_slice %5 {offsets = [0, 4], sizes = [8, 64], strides = [1, 1]} : vector<10x72xf32> to vector<8x64xf32>
    %c1 = arith.constant 1 : index
    %c0_3 = arith.constant 0 : index
    %15 = vector.load %arg3[%c1, %c0_3] : memref<9x64xf32, #tpu.memory_space<vmem>>, vector<1x64xf32>
    %16 = vector.shape_cast %15 : vector<1x64xf32> to vector<64xf32>
    %17 = vector.shape_cast %16 : vector<64xf32> to vector<1x64xf32>
    %18 = vector.broadcast %17 : vector<1x64xf32> to vector<8x64xf32>
    %19 = arith.mulf %14, %18 : vector<8x64xf32>
    %20 = arith.addf %13, %19 : vector<8x64xf32>
    %21 = vector.extract_strided_slice %5 {offsets = [0, 8], sizes = [8, 64], strides = [1, 1]} : vector<10x72xf32> to vector<8x64xf32>
    %c2 = arith.constant 2 : index
    %c0_4 = arith.constant 0 : index
    %22 = vector.load %arg3[%c2, %c0_4] : memref<9x64xf32, #tpu.memory_space<vmem>>, vector<1x64xf32>
    %23 = vector.shape_cast %22 : vector<1x64xf32> to vector<64xf32>
    %24 = vector.shape_cast %23 : vector<64xf32> to vector<1x64xf32>
    %25 = vector.broadcast %24 : vector<1x64xf32> to vector<8x64xf32>
    %26 = arith.mulf %21, %25 : vector<8x64xf32>
    %27 = arith.addf %20, %26 : vector<8x64xf32>
    %28 = vector.extract_strided_slice %5 {offsets = [1, 0], sizes = [8, 64], strides = [1, 1]} : vector<10x72xf32> to vector<8x64xf32>
    %c3 = arith.constant 3 : index
    %c0_5 = arith.constant 0 : index
    %29 = vector.load %arg3[%c3, %c0_5] : memref<9x64xf32, #tpu.memory_space<vmem>>, vector<1x64xf32>
    %30 = vector.shape_cast %29 : vector<1x64xf32> to vector<64xf32>
    %31 = vector.shape_cast %30 : vector<64xf32> to vector<1x64xf32>
    %32 = vector.broadcast %31 : vector<1x64xf32> to vector<8x64xf32>
    %33 = arith.mulf %28, %32 : vector<8x64xf32>
    %34 = arith.addf %27, %33 : vector<8x64xf32>
    %35 = vector.extract_strided_slice %5 {offsets = [1, 4], sizes = [8, 64], strides = [1, 1]} : vector<10x72xf32> to vector<8x64xf32>
    %c4 = arith.constant 4 : index
    %c0_6 = arith.constant 0 : index
    %36 = vector.load %arg3[%c4, %c0_6] : memref<9x64xf32, #tpu.memory_space<vmem>>, vector<1x64xf32>
    %37 = vector.shape_cast %36 : vector<1x64xf32> to vector<64xf32>
    %38 = vector.shape_cast %37 : vector<64xf32> to vector<1x64xf32>
    %39 = vector.broadcast %38 : vector<1x64xf32> to vector<8x64xf32>
    %40 = arith.mulf %35, %39 : vector<8x64xf32>
    %41 = arith.addf %34, %40 : vector<8x64xf32>
    %42 = vector.extract_strided_slice %5 {offsets = [1, 8], sizes = [8, 64], strides = [1, 1]} : vector<10x72xf32> to vector<8x64xf32>
    %c5 = arith.constant 5 : index
    %c0_7 = arith.constant 0 : index
    %43 = vector.load %arg3[%c5, %c0_7] : memref<9x64xf32, #tpu.memory_space<vmem>>, vector<1x64xf32>
    %44 = vector.shape_cast %43 : vector<1x64xf32> to vector<64xf32>
    %45 = vector.shape_cast %44 : vector<64xf32> to vector<1x64xf32>
    %46 = vector.broadcast %45 : vector<1x64xf32> to vector<8x64xf32>
    %47 = arith.mulf %42, %46 : vector<8x64xf32>
    %48 = arith.addf %41, %47 : vector<8x64xf32>
    %49 = vector.extract_strided_slice %5 {offsets = [2, 0], sizes = [8, 64], strides = [1, 1]} : vector<10x72xf32> to vector<8x64xf32>
    %c6 = arith.constant 6 : index
    %c0_8 = arith.constant 0 : index
    %50 = vector.load %arg3[%c6, %c0_8] : memref<9x64xf32, #tpu.memory_space<vmem>>, vector<1x64xf32>
    %51 = vector.shape_cast %50 : vector<1x64xf32> to vector<64xf32>
    %52 = vector.shape_cast %51 : vector<64xf32> to vector<1x64xf32>
    %53 = vector.broadcast %52 : vector<1x64xf32> to vector<8x64xf32>
    %54 = arith.mulf %49, %53 : vector<8x64xf32>
    %55 = arith.addf %48, %54 : vector<8x64xf32>
    %56 = vector.extract_strided_slice %5 {offsets = [2, 4], sizes = [8, 64], strides = [1, 1]} : vector<10x72xf32> to vector<8x64xf32>
    %c7 = arith.constant 7 : index
    %c0_9 = arith.constant 0 : index
    %57 = vector.load %arg3[%c7, %c0_9] : memref<9x64xf32, #tpu.memory_space<vmem>>, vector<1x64xf32>
    %58 = vector.shape_cast %57 : vector<1x64xf32> to vector<64xf32>
    %59 = vector.shape_cast %58 : vector<64xf32> to vector<1x64xf32>
    %60 = vector.broadcast %59 : vector<1x64xf32> to vector<8x64xf32>
    %61 = arith.mulf %56, %60 : vector<8x64xf32>
    %62 = arith.addf %55, %61 : vector<8x64xf32>
    %63 = vector.extract_strided_slice %5 {offsets = [2, 8], sizes = [8, 64], strides = [1, 1]} : vector<10x72xf32> to vector<8x64xf32>
    %c8 = arith.constant 8 : index
    %c0_10 = arith.constant 0 : index
    %64 = vector.load %arg3[%c8, %c0_10] : memref<9x64xf32, #tpu.memory_space<vmem>>, vector<1x64xf32>
    %65 = vector.shape_cast %64 : vector<1x64xf32> to vector<64xf32>
    %66 = vector.shape_cast %65 : vector<64xf32> to vector<1x64xf32>
    %67 = vector.broadcast %66 : vector<1x64xf32> to vector<8x64xf32>
    %68 = arith.mulf %63, %67 : vector<8x64xf32>
    %69 = arith.addf %62, %68 : vector<8x64xf32>
    %c0_11 = arith.constant 0 : index
    %c0_12 = arith.constant 0 : index
    %70 = vector.load %arg4[%c0_11, %c0_12] : memref<1x64xf32, #tpu.memory_space<vmem>>, vector<1x64xf32>
    %71 = vector.shape_cast %70 : vector<1x64xf32> to vector<64xf32>
    %72 = vector.shape_cast %71 : vector<64xf32> to vector<1x64xf32>
    %73 = vector.broadcast %72 : vector<1x64xf32> to vector<8x64xf32>
    %74 = arith.addf %69, %73 : vector<8x64xf32>
    %cst_13 = arith.constant 0.000000e+00 : f32
    %75 = vector.broadcast %cst_13 : f32 to vector<8x64xf32>
    %76 = arith.maximumf %74, %75 : vector<8x64xf32>
    %77 = vector.shape_cast %76 : vector<8x64xf32> to vector<8x16x4xf32>
    %cst_14 = arith.constant 0.000000e+00 : f32
    %78 = vector.broadcast %cst_14 : f32 to vector<8x16x8xf32>
    %79 = vector.extract_strided_slice %77 {offsets = [0, 0, 0], sizes = [8, 16, 1], strides = [1, 1, 1]} : vector<8x16x4xf32> to vector<8x16x1xf32>
    %c0_15 = arith.constant 0 : index
    %c0_16 = arith.constant 0 : index
    %80 = vector.load %arg5[%c0_15, %c0_16] : memref<4x8xf32, #tpu.memory_space<vmem>>, vector<1x8xf32>
    %81 = vector.shape_cast %80 : vector<1x8xf32> to vector<8xf32>
    %82 = vector.shape_cast %81 : vector<8xf32> to vector<1x1x8xf32>
    %83 = vector.broadcast %79 : vector<8x16x1xf32> to vector<8x16x8xf32>
    %84 = vector.broadcast %82 : vector<1x1x8xf32> to vector<8x16x8xf32>
    %85 = arith.mulf %83, %84 : vector<8x16x8xf32>
    %86 = arith.addf %78, %85 : vector<8x16x8xf32>
    %87 = vector.extract_strided_slice %77 {offsets = [0, 0, 1], sizes = [8, 16, 1], strides = [1, 1, 1]} : vector<8x16x4xf32> to vector<8x16x1xf32>
    %c1_17 = arith.constant 1 : index
    %c0_18 = arith.constant 0 : index
    %88 = vector.load %arg5[%c1_17, %c0_18] : memref<4x8xf32, #tpu.memory_space<vmem>>, vector<1x8xf32>
    %89 = vector.shape_cast %88 : vector<1x8xf32> to vector<8xf32>
    %90 = vector.shape_cast %89 : vector<8xf32> to vector<1x1x8xf32>
    %91 = vector.broadcast %87 : vector<8x16x1xf32> to vector<8x16x8xf32>
    %92 = vector.broadcast %90 : vector<1x1x8xf32> to vector<8x16x8xf32>
    %93 = arith.mulf %91, %92 : vector<8x16x8xf32>
    %94 = arith.addf %86, %93 : vector<8x16x8xf32>
    %95 = vector.extract_strided_slice %77 {offsets = [0, 0, 2], sizes = [8, 16, 1], strides = [1, 1, 1]} : vector<8x16x4xf32> to vector<8x16x1xf32>
    %c2_19 = arith.constant 2 : index
    %c0_20 = arith.constant 0 : index
    %96 = vector.load %arg5[%c2_19, %c0_20] : memref<4x8xf32, #tpu.memory_space<vmem>>, vector<1x8xf32>
    %97 = vector.shape_cast %96 : vector<1x8xf32> to vector<8xf32>
    %98 = vector.shape_cast %97 : vector<8xf32> to vector<1x1x8xf32>
    %99 = vector.broadcast %95 : vector<8x16x1xf32> to vector<8x16x8xf32>
    %100 = vector.broadcast %98 : vector<1x1x8xf32> to vector<8x16x8xf32>
    %101 = arith.mulf %99, %100 : vector<8x16x8xf32>
    %102 = arith.addf %94, %101 : vector<8x16x8xf32>
    %103 = vector.extract_strided_slice %77 {offsets = [0, 0, 3], sizes = [8, 16, 1], strides = [1, 1, 1]} : vector<8x16x4xf32> to vector<8x16x1xf32>
    %c3_21 = arith.constant 3 : index
    %c0_22 = arith.constant 0 : index
    %104 = vector.load %arg5[%c3_21, %c0_22] : memref<4x8xf32, #tpu.memory_space<vmem>>, vector<1x8xf32>
    %105 = vector.shape_cast %104 : vector<1x8xf32> to vector<8xf32>
    %106 = vector.shape_cast %105 : vector<8xf32> to vector<1x1x8xf32>
    %107 = vector.broadcast %103 : vector<8x16x1xf32> to vector<8x16x8xf32>
    %108 = vector.broadcast %106 : vector<1x1x8xf32> to vector<8x16x8xf32>
    %109 = arith.mulf %107, %108 : vector<8x16x8xf32>
    %110 = arith.addf %102, %109 : vector<8x16x8xf32>
    %c0_23 = arith.constant 0 : index
    %c0_24 = arith.constant 0 : index
    %111 = vector.load %arg6[%c0_23, %c0_24] : memref<1x8xf32, #tpu.memory_space<vmem>>, vector<1x8xf32>
    %112 = vector.shape_cast %111 : vector<1x8xf32> to vector<8xf32>
    %113 = vector.shape_cast %112 : vector<8xf32> to vector<1x1x8xf32>
    %114 = vector.broadcast %113 : vector<1x1x8xf32> to vector<8x16x8xf32>
    %115 = arith.addf %110, %114 : vector<8x16x8xf32>
    %cst_25 = arith.constant 0.000000e+00 : f32
    %116 = vector.broadcast %cst_25 : f32 to vector<8x16x8xf32>
    %117 = arith.maximumf %115, %116 : vector<8x16x8xf32>
    %118 = vector.shape_cast %117 : vector<8x16x8xf32> to vector<8x128xf32>
    %c0_26 = arith.constant 0 : index
    %c0_27 = arith.constant 0 : index
    %c0_28 = arith.constant 0 : index
    %119 = vector.load %arg7[%c0_26, %c0_27, %c0_28] : memref<1x8x128xf32, #tpu.memory_space<vmem>>, vector<1x8x128xf32>
    %120 = vector.shape_cast %119 : vector<1x8x128xf32> to vector<8x128xf32>
    %121 = vector.shape_cast %118 : vector<8x128xf32> to vector<1x8x128xf32>
    tpu.vector_store %arg7[%c0_26, %c0_27, %c0_28], %121 {strides = array<i32>} : memref<1x8x128xf32, #tpu.memory_space<vmem>>, vector<1x8x128xf32>,
    return
  }
  func.func @transform_0(%arg0: i32, %arg1: i32) -> (i32, i32, i32) {
    %c0_i32 = arith.constant 0 : i32
    %c0_i32_0 = arith.constant 0 : i32
    %c0_i32_1 = arith.constant 0 : i32
    return %arg0, %c0_i32, %c0_i32_0 : i32, i32, i32
  }
  func.func @transform_1(%arg0: i32, %arg1: i32) -> (i32, i32) {
    %c0_i32 = arith.constant 0 : i32
    %c0_i32_0 = arith.constant 0 : i32
    %c0_i32_1 = arith.constant 0 : i32
    return %c0_i32, %c0_i32_0 : i32, i32
  }
  func.func @transform_2(%arg0: i32, %arg1: i32) -> (i32, i32) {
    %c0_i32 = arith.constant 0 : i32
    %c0_i32_0 = arith.constant 0 : i32
    %c0_i32_1 = arith.constant 0 : i32
    return %c0_i32, %c0_i32_0 : i32, i32
  }
  func.func @transform_3(%arg0: i32, %arg1: i32) -> (i32, i32) {
    %c0_i32 = arith.constant 0 : i32
    %c0_i32_0 = arith.constant 0 : i32
    %c0_i32_1 = arith.constant 0 : i32
    return %c0_i32, %c0_i32_0 : i32, i32
  }
  func.func @transform_4(%arg0: i32, %arg1: i32) -> (i32, i32) {
    %c0_i32 = arith.constant 0 : i32
    %c0_i32_0 = arith.constant 0 : i32
    %c0_i32_1 = arith.constant 0 : i32
    return %c0_i32, %c0_i32_0 : i32, i32
  }
  func.func @transform_5(%arg0: i32, %arg1: i32) -> (i32, i32, i32) {
    %c0_i32 = arith.constant 0 : i32
    %c0_i32_0 = arith.constant 0 : i32
    return %arg0, %arg1, %c0_i32 : i32, i32, i32
  }
}

</mosaic_0001>

<llo_original>
// kernel: tpu_custom_call.1
$region0: #{tpu_custom_call.1}
  #allocation0 [shape = 'u32[]', space=smem, size = 0x4, offset = 0x4, fixed_abs, tag = 'smem constant byte address 0x4 - core index']
  #allocation1 [shape = 'u32[72,128]{1,0:T(1,128)}', space=vmem, size = 0x9000, scoped, tag = 'internal scratch']
  %s0 = inlined_call_operand.vmem [shape: f32[2,18,72], index: 0, kind: input, shape index: {}]
  %s1 = inlined_call_operand.vmem [shape: f32[9,64], index: 1, kind: input, shape index: {}]
  %s2 = inlined_call_operand.vmem [shape: f32[1,64], index: 2, kind: input, shape index: {}]
  %s3 = inlined_call_operand.vmem [shape: f32[4,8], index: 3, kind: input, shape index: {}]
  %s4 = inlined_call_operand.vmem [shape: f32[1,8], index: 4, kind: input, shape index: {}]
  %s5 = inlined_call_operand.hbm [shape: f32[2,16,128], index: 5, kind: output, shape index: {}]
  %s6 = sld [smem:[#allocation0]]
  $region53: #{tpu_custom_call.1} parent=0
    _
  %s8 = ssub.s32 1, %s6
  %s9 = scalar_select 0, %s8, %s6
  $region1: #{tpu_custom_call.1} parent=0
    #allocation2 [shape = 'u8[8192]{0}', space=vmem, size = 0x2000, scoped, tag = 'output window, operand 0']
    #allocation3 [shape = 's32[2]{0}', space=sflag, size = 0x8, scoped, tag = 'scoped memory for tpu_custom_call.1']
    %10 = vsyncpa [#allocation3], 0
    %s11 = scalar_lea.sflag [#allocation3], 1
    %12 = vsyncpa %s11, 0
    loop: start=0, step=1, limit=6
    $region2: #{tpu_custom_call.1} parent=1 // loop_pre_header
      _
    $region3: #{tpu_custom_call.1} parent=1 // loop_header
      %s14 = sphi 0, %s18
      %p15 = scmp.ge.s32.totalorder %s14, 6
      %s21 = sphi 0, %s33
      %s22 = sphi 0, %s29
      %s23 = sphi 0, %s21
      %s24 = sphi 0, %s22
      %s25 = sphi 0, %s23
      %s26 = sphi 0, %s24
      %s36 = sphi 0, %s38
      %s39 = sphi 0, %s36
      %s40 = sphi 0, %s39
      %s56 = sphi 0, %s40
      %s60 = sphi 0, %s60
      %s62 = sphi 0, %s60
      %s63 = sphi 0, %s62
      %s77 = sphi 0, %s63
      %s81 = sphi 0, %s81
      %s83 = sphi 0, %s81
      %s84 = sphi 0, %s83
      %s98 = sphi 0, %s84
      %s102 = sphi 0, %s102
      %s104 = sphi 0, %s102
      %s105 = sphi 0, %s104
      %s119 = sphi 0, %s105
      %s123 = sphi 0, %s123
      %s125 = sphi 0, %s123
      %s126 = sphi 0, %s125
      %s140 = sphi 0, %s126
      %s148 = sphi 0, %s150
      %s151 = sphi 0, %s148
      %s152 = sphi 0, %s151
      %s168 = sphi 0, %s152
    $region4: #{tpu_custom_call.1} parent=1 // loop_header_branch
      %17 = sbr.rel (%p15) target = $region8
    $region5: #{tpu_custom_call.1} parent=1 // loop_body
      %s19 = ssub.s32 %s14, 1
      %s20 = ssub.s32 %s14, 2
      %s27 = sadd.s32 1, %s22
      %p28 = scmp.ge.s32.totalorder %s27, 2
      %s29 = scalar_select %p28, 0, %s27
      %s30 = sadd.s32 1, %s21
      %s31 = scalar_select %p28, %s30, %s21
      %p32 = scmp.ge.s32.totalorder %s31, 2
      %s33 = scalar_select %p32, 0, %s31
      %s34 = ssub.s32 %s21, %s33
      %p35 = scmp.eq.s32.totalorder %s34, 0
      %s37 = sadd.s32 %s36, 1
      %s38 = scalar_select %p35, %s36, %s37
      %p41 = pneg %p35
      %p42 = scmp.eq.s32.totalorder %s14, 3
      %p43 = por %p41, %p42
      %p44 = scmp.ne.s32.totalorder %s36, %s39
      %p45 = scmp.eq.s32.totalorder %s14, 0
      %p46 = por %p44, %p45
      %p47 = scmp.ne.s32.totalorder %s36, %s39
      %p48 = scmp.eq.s32.totalorder %s19, 3
      %p49 = por %p47, %p48
      %p50 = scmp.ne.s32.totalorder %s39, %s40
      %p51 = scmp.eq.s32.totalorder %s19, 0
      %p52 = por %p50, %p51
      %p53 = scmp.ne.s32.totalorder %s39, %s40
      %p54 = scmp.eq.s32.totalorder %s20, 3
      %p55 = por %p53, %p54
      %p57 = scmp.ne.s32.totalorder %s40, %s56
      %p58 = scmp.eq.s32.totalorder %s20, 0
      %p59 = por %p57, %p58
      %s61 = sadd.s32 %s60, 1
      %p64 = scmp.eq.s32.totalorder %s14, 3
      %p65 = scmp.ne.s32.totalorder %s60, %s62
      %p66 = scmp.eq.s32.totalorder %s14, 0
      %p67 = por %p65, %p66
      %p68 = scmp.ne.s32.totalorder %s60, %s62
      %p69 = scmp.eq.s32.totalorder %s19, 3
      %p70 = por %p68, %p69
      %p71 = scmp.ne.s32.totalorder %s62, %s63
      %p72 = scmp.eq.s32.totalorder %s19, 0
      %p73 = por %p71, %p72
      %p74 = scmp.ne.s32.totalorder %s62, %s63
      %p75 = scmp.eq.s32.totalorder %s20, 3
      %p76 = por %p74, %p75
      %p78 = scmp.ne.s32.totalorder %s63, %s77
      %p79 = scmp.eq.s32.totalorder %s20, 0
      %p80 = por %p78, %p79
      %s82 = sadd.s32 %s81, 1
      %p85 = scmp.eq.s32.totalorder %s14, 3
      %p86 = scmp.ne.s32.totalorder %s81, %s83
      %p87 = scmp.eq.s32.totalorder %s14, 0
      %p88 = por %p86, %p87
      %p89 = scmp.ne.s32.totalorder %s81, %s83
      %p90 = scmp.eq.s32.totalorder %s19, 3
      %p91 = por %p89, %p90
      %p92 = scmp.ne.s32.totalorder %s83, %s84
      %p93 = scmp.eq.s32.totalorder %s19, 0
      %p94 = por %p92, %p93
      %p95 = scmp.ne.s32.totalorder %s83, %s84
      %p96 = scmp.eq.s32.totalorder %s20, 3
      %p97 = por %p95, %p96
      %p99 = scmp.ne.s32.totalorder %s84, %s98
      %p100 = scmp.eq.s32.totalorder %s20, 0
      %p101 = por %p99, %p100
      %s103 = sadd.s32 %s102, 1
      %p106 = scmp.eq.s32.totalorder %s14, 3
      %p107 = scmp.ne.s32.totalorder %s102, %s104
      %p108 = scmp.eq.s32.totalorder %s14, 0
      %p109 = por %p107, %p108
      %p110 = scmp.ne.s32.totalorder %s102, %s104
      %p111 = scmp.eq.s32.totalorder %s19, 3
      %p112 = por %p110, %p111
      %p113 = scmp.ne.s32.totalorder %s104, %s105
      %p114 = scmp.eq.s32.totalorder %s19, 0
      %p115 = por %p113, %p114
      %p116 = scmp.ne.s32.totalorder %s104, %s105
      %p117 = scmp.eq.s32.totalorder %s20, 3
      %p118 = por %p116, %p117
      %p120 = scmp.ne.s32.totalorder %s105, %s119
      %p121 = scmp.eq.s32.totalorder %s20, 0
      %p122 = por %p120, %p121
      %s124 = sadd.s32 %s123, 1
      %p127 = scmp.eq.s32.totalorder %s14, 3
      %p128 = scmp.ne.s32.totalorder %s123, %s125
      %p129 = scmp.eq.s32.totalorder %s14, 0
      %p130 = por %p128, %p129
      %p131 = scmp.ne.s32.totalorder %s123, %s125
      %p132 = scmp.eq.s32.totalorder %s19, 3
      %p133 = por %p131, %p132
      %p134 = scmp.ne.s32.totalorder %s125, %s126
      %p135 = scmp.eq.s32.totalorder %s19, 0
      %p136 = por %p134, %p135
      %p137 = scmp.ne.s32.totalorder %s125, %s126
      %p138 = scmp.eq.s32.totalorder %s20, 3
      %p139 = por %p137, %p138
      %p141 = scmp.ne.s32.totalorder %s126, %s140
      %p142 = scmp.eq.s32.totalorder %s20, 0
      %p143 = por %p141, %p142
      %s144 = ssub.s32 %s21, %s33
      %s145 = ssub.s32 %s22, %s29
      %s146 = sor.u32 %s144, %s145
      %p147 = scmp.eq.s32.totalorder %s146, 0
      %s149 = sadd.s32 %s148, 1
      %s150 = scalar_select %p147, %s148, %s149
      %p153 = pneg %p147
      %p154 = scmp.eq.s32.totalorder %s14, 3
      %p155 = por %p153, %p154
      %p156 = scmp.ne.s32.totalorder %s148, %s151
      %p157 = scmp.eq.s32.totalorder %s14, 0
      %p158 = por %p156, %p157
      %p159 = scmp.ne.s32.totalorder %s148, %s151
      %p160 = scmp.eq.s32.totalorder %s19, 3
      %p161 = por %p159, %p160
      %p162 = scmp.ne.s32.totalorder %s151, %s152
      %p163 = scmp.eq.s32.totalorder %s19, 0
      %p164 = por %p162, %p163
      %p165 = scmp.ne.s32.totalorder %s151, %s152
      %p166 = scmp.eq.s32.totalorder %s20, 3
      %p167 = por %p165, %p166
      %p169 = scmp.ne.s32.totalorder %s152, %s168
      %p170 = scmp.eq.s32.totalorder %s20, 0
      %p171 = por %p169, %p170
      %p172 = scmp.le.s32.totalorder 1, %s14
      %p173 = scmp.lt.s32.totalorder %s14, 5
      %p174 = pnand %p172, %p173
      %p175 = pneg %p174
      // Predicated region
      $region9: #{tpu_custom_call.1} parent=5 // pred_check
        _
      $region10: #{tpu_custom_call.1} parent=5 // pred_check_branch
        %177 = sbr.rel (%p174) target = $region12
      $region11: #{tpu_custom_call.1} parent=5 // pred_region
        %s178 = ssub.s32 %s14, 1
        // Predicated region
        $region13: #{tpu_custom_call.1} parent=11 // pred_check
          %p179 = pneg %p73
        $region14: #{tpu_custom_call.1} parent=11 // pred_check_branch
          %181 = sbr.rel (%p179) target = $region16
        $region15: #{tpu_custom_call.1} parent=11 // pred_region
          _
        $region16: #{tpu_custom_call.1} parent=11 // pred_fallthru
          _
        // Predicated region
        $region17: #{tpu_custom_call.1} parent=11 // pred_check
          %p182 = pneg %p94
        $region18: #{tpu_custom_call.1} parent=11 // pred_check_branch
          %184 = sbr.rel (%p182) target = $region20
        $region19: #{tpu_custom_call.1} parent=11 // pred_region
          _
        $region20: #{tpu_custom_call.1} parent=11 // pred_fallthru
          _
        // Predicated region
        $region21: #{tpu_custom_call.1} parent=11 // pred_check
          %p185 = pneg %p115
        $region22: #{tpu_custom_call.1} parent=11 // pred_check_branch
          %187 = sbr.rel (%p185) target = $region24
        $region23: #{tpu_custom_call.1} parent=11 // pred_region
          _
        $region24: #{tpu_custom_call.1} parent=11 // pred_fallthru
          _
        // Predicated region
        $region25: #{tpu_custom_call.1} parent=11 // pred_check
          %p188 = pneg %p136
        $region26: #{tpu_custom_call.1} parent=11 // pred_check_branch
          %190 = sbr.rel (%p188) target = $region28
        $region27: #{tpu_custom_call.1} parent=11 // pred_region
          _
        $region28: #{tpu_custom_call.1} parent=11 // pred_fallthru
          _
      $region12: #{tpu_custom_call.1} parent=5 // pred_fallthru
        _
      %p191 = scmp.lt.s32.totalorder %s14, 4
      // Predicated region
      $region29: #{tpu_custom_call.1} parent=5 // pred_check
        %p192 = pneg %p191
      $region30: #{tpu_custom_call.1} parent=5 // pred_check_branch
        %194 = sbr.rel (%p192) target = $region32
      $region31: #{tpu_custom_call.1} parent=5 // pred_region
        // Predicated region
        $region33: #{tpu_custom_call.1} parent=31 // pred_check
          %p195 = pneg %p46
        $region34: #{tpu_custom_call.1} parent=31 // pred_check_branch
          %197 = sbr.rel (%p195) target = $region36
        $region35: #{tpu_custom_call.1} parent=31 // pred_region
          %p198 = scmp.lt.s32.totalorder %s21, 1
          %s199 = scalar_select %p198, %s21, 1
          %s200 = smul.addr %s199, 3
          %s201 = smul.addr %s200, 8
          %s202 = scalar_lea.vmem %s0, %s201
        $region36: #{tpu_custom_call.1} parent=31 // pred_fallthru
          _
      $region32: #{tpu_custom_call.1} parent=5 // pred_fallthru
        _
      %p203 = scmp.le.s32.totalorder 1, %s14
      %p204 = scmp.lt.s32.totalorder %s14, 5
      %p205 = pnand %p203, %p204
      %p206 = pneg %p205
      // Predicated region
      $region37: #{tpu_custom_call.1} parent=5 // pred_check
        _
      $region38: #{tpu_custom_call.1} parent=5 // pred_check_branch
        %208 = sbr.rel (%p205) target = $region40
      $region39: #{tpu_custom_call.1} parent=5 // pred_region
        %s209 = ssub.s32 %s14, 1
        %p210 = scmp.lt.s32.totalorder %s23, 1
        %s211 = scalar_select %p210, %s23, 1
        %s212 = smul.addr %s211, 3
        %s213 = smul.addr %s212, 8
        %s214 = scalar_lea.vmem %s0, %s213
        %p215 = pneg %p52
        %p216 = pneg %p49
        %p217 = pneg %p73
        %p218 = pneg %p70
        %p219 = pneg %p94
        %p220 = pneg %p91
        %p221 = pneg %p115
        %p222 = pneg %p112
        %p223 = pneg %p136
        %p224 = pneg %p133
        %p225 = pneg %p164
        %p226 = pneg %p161
        %s227 = sand.u32 %s151, 1
        %s228 = scalar_lea.sflag [#allocation3], %s227
        %s229 = sand.u32 %s151, 1
        %s230 = smul.addr %s229, 8
        %s231 = scalar_lea.vmem [#allocation2], %s230
        %p232 = scmp.lt.s32.totalorder %s23, 1
        %s233 = scalar_select %p232, %s23, 1
        %s234 = smul.addr %s233, 3
        %s235 = smul.addr %s234, 8
        %s236 = scalar_lea.vmem %s0, %s235
        %s237 = smul.u32 %s24, 8
        %s238 = scalar_lea.vmem %s236, %s237
        %v239 = vld [vmem:[%s238] sm:$0xff]
        %v240 = vld [vmem:[%s238 + $0x8] sm:$0x3]
        %v241 = vld [vmem:[%s1] sm:$0x1]
        %v242 = vperm.slane %v241, 0
        %v243 = vmul.f32 %v239, %v242
        %v244 = vadd.f32 %v243, 0.0
        %v245 = vld [vmem:[%s1 + $0x1] sm:$0x1]
        %v246 = vperm.slane %v245, 0
        %248 = vrot.lane.b32.xlu0 %v246, 4
        %v249 = vpop.permute.xlu0 %248
        %v251 = vmul.f32 %v239, %v249
        %253 = vrot.lane.b32.xlu0 %v251, 124
        %v254 = vpop.permute.xlu0 %253
        %v256 = vadd.f32 %v244, %v254
        %v257 = vld [vmem:[%s1 + $0x2] sm:$0x1]
        %v258 = vperm.slane %v257, 0
        %260 = vrot.lane.b32.xlu0 %v258, 8
        %v261 = vpop.permute.xlu0 %260
        %v263 = vmul.f32 %v239, %v261
        %265 = vrot.lane.b32.xlu0 %v263, 120
        %v266 = vpop.permute.xlu0 %265
        %v268 = vadd.f32 %v256, %v266
        %v269 = vld [vmem:[%s1 + $0x3] sm:$0x1]
        %v270 = vperm.slane %v269, 0
        %v271 = vmul.f32 %v239, %v270
        %v272 = vmul.f32 %v240, %v270
        %vm275 = vcmask 1046528
        %v276 = vrot.slane %v271, 1
        %v277 = vrot.slane %v272, 1
        %v278 = vsel %vm275, %v276, %v277
        %v280 = vadd.f32 %v268, %v278
        %v281 = vld [vmem:[%s1 + $0x4] sm:$0x1]
        %v282 = vperm.slane %v281, 0
        %284 = vrot.lane.b32.xlu0 %v282, 4
        %v285 = vpop.permute.xlu0 %284
        %v287 = vmul.f32 %v239, %v285
        %v288 = vmul.f32 %v240, %v285
        %v291 = vrot.slane %v287, 1
        %v292 = vrot.slane %v288, 1
        %v293 = vsel %vm275, %v291, %v292
        %294 = vrot.lane.b32.xlu0 %v293, 124
        %v295 = vpop.permute.xlu0 %294
        %v297 = vadd.f32 %v280, %v295
        %v298 = vld [vmem:[%s1 + $0x5] sm:$0x1]
        %v299 = vperm.slane %v298, 0
        %301 = vrot.lane.b32.xlu0 %v299, 8
        %v302 = vpop.permute.xlu0 %301
        %v304 = vmul.f32 %v239, %v302
        %v305 = vmul.f32 %v240, %v302
        %v308 = vrot.slane %v304, 1
        %v309 = vrot.slane %v305, 1
        %v310 = vsel %vm275, %v308, %v309
        %311 = vrot.lane.b32.xlu0 %v310, 120
        %v312 = vpop.permute.xlu0 %311
        %v314 = vadd.f32 %v297, %v312
        %v315 = vld [vmem:[%s1 + $0x6] sm:$0x1]
        %v316 = vperm.slane %v315, 0
        %v317 = vmul.f32 %v239, %v316
        %v318 = vmul.f32 %v240, %v316
        %vm321 = vcmask 1045504
        %v322 = vrot.slane %v317, 2
        %v323 = vrot.slane %v318, 2
        %v324 = vsel %vm321, %v322, %v323
        %v326 = vadd.f32 %v314, %v324
        %v327 = vld [vmem:[%s1 + $0x7] sm:$0x1]
        %v328 = vperm.slane %v327, 0
        %330 = vrot.lane.b32.xlu0 %v328, 4
        %v331 = vpop.permute.xlu0 %330
        %v333 = vmul.f32 %v239, %v331
        %v334 = vmul.f32 %v240, %v331
        %v337 = vrot.slane %v333, 2
        %v338 = vrot.slane %v334, 2
        %v339 = vsel %vm321, %v337, %v338
        %340 = vrot.lane.b32.xlu0 %v339, 124
        %v341 = vpop.permute.xlu0 %340
        %v343 = vadd.f32 %v326, %v341
        %v344 = vld [vmem:[%s1 + $0x8] sm:$0x1]
        %v345 = vperm.slane %v344, 0
        %347 = vrot.lane.b32.xlu0 %v345, 8
        %v348 = vpop.permute.xlu0 %347
        %v350 = vmul.f32 %v239, %v348
        %v351 = vmul.f32 %v240, %v348
        %v354 = vrot.slane %v350, 2
        %v355 = vrot.slane %v351, 2
        %v356 = vsel %vm321, %v354, %v355
        %357 = vrot.lane.b32.xlu0 %v356, 120
        %v358 = vpop.permute.xlu0 %357
        %v360 = vadd.f32 %v343, %v358
        %v361 = vld [vmem:[%s2] sm:$0x1]
        %v363 = vperm.slane %v361, 0
        %v365 = vadd.f32 %v360, %v363
        %v366 = vmax.f32 %v365, 0.0
        %368 = vrot.lane.b32.xlu0 %v366, 124
        %v369 = vpop.permute.xlu0 %368
        %371 = vrot.lane.b32.xlu0 %v366, 120
        %v372 = vpop.permute.xlu0 %371
        %374 = vrot.lane.b32.xlu0 %v366, 116
        %v375 = vpop.permute.xlu0 %374
        %377 = vrot.lane.b32.xlu0 %v366, 112
        %v378 = vpop.permute.xlu0 %377
        %380 = vrot.lane.b32.xlu0 %v366, 108
        %v381 = vpop.permute.xlu0 %380
        %383 = vrot.lane.b32.xlu0 %v366, 104
        %v384 = vpop.permute.xlu0 %383
        %386 = vrot.lane.b32.xlu0 %v366, 100
        %v387 = vpop.permute.xlu0 %386
        %389 = vrot.lane.b32.xlu0 %v366, 96
        %v390 = vpop.permute.xlu0 %389
        %392 = vrot.lane.b32.xlu0 %v366, 92
        %v393 = vpop.permute.xlu0 %392
        %395 = vrot.lane.b32.xlu0 %v366, 88
        %v396 = vpop.permute.xlu0 %395
        %398 = vrot.lane.b32.xlu0 %v366, 84
        %v399 = vpop.permute.xlu0 %398
        %401 = vrot.lane.b32.xlu0 %v366, 80
        %v402 = vpop.permute.xlu0 %401
        %404 = vrot.lane.b32.xlu0 %v366, 76
        %v405 = vpop.permute.xlu0 %404
        %407 = vrot.lane.b32.xlu0 %v366, 72
        %v408 = vpop.permute.xlu0 %407
        %410 = vrot.lane.b32.xlu0 %v366, 68
        %v411 = vpop.permute.xlu0 %410
        %v413 = vrot.slane %v372, 4
        %vm414 = vcmask 1047556
        %v415 = vsel %vm414, %v413, %v366
        %v416 = vrot.slane %v366, 4
        %v417 = vsel %vm414, %v372, %v416
        %v419 = vunpack.c.l.s4 1983009808
        %v420 = vunpack.c.0.s8 %v419
        %v421 = vperm.slane %v415, %v420
        %v423 = vunpack.c.l.s4 1983009808
        %v424 = vunpack.c.0.s8 %v423
        %v425 = vperm.slane %v417, %v424
        %v426 = vrot.slane %v375, 4
        %v427 = vsel %vm414, %v426, %v369
        %v428 = vrot.slane %v369, 4
        %v429 = vsel %vm414, %v375, %v428
        %v431 = vunpack.c.l.s4 1983009808
        %v432 = vunpack.c.0.s8 %v431
        %v433 = vperm.slane %v427, %v432
        %v435 = vunpack.c.l.s4 1983009808
        %v436 = vunpack.c.0.s8 %v435
        %v437 = vperm.slane %v429, %v436
        %v438 = vrot.slane %v384, 4
        %v439 = vsel %vm414, %v438, %v378
        %v440 = vrot.slane %v378, 4
        %v441 = vsel %vm414, %v384, %v440
        %v443 = vunpack.c.l.s4 1983009808
        %v444 = vunpack.c.0.s8 %v443
        %v445 = vperm.slane %v439, %v444
        %v447 = vunpack.c.l.s4 1983009808
        %v448 = vunpack.c.0.s8 %v447
        %v449 = vperm.slane %v441, %v448
        %v450 = vrot.slane %v387, 4
        %v451 = vsel %vm414, %v450, %v381
        %v452 = vrot.slane %v381, 4
        %v453 = vsel %vm414, %v387, %v452
        %v455 = vunpack.c.l.s4 1983009808
        %v456 = vunpack.c.0.s8 %v455
        %v457 = vperm.slane %v451, %v456
        %v459 = vunpack.c.l.s4 1983009808
        %v460 = vunpack.c.0.s8 %v459
        %v461 = vperm.slane %v453, %v460
        %v462 = vrot.slane %v433, 4
        %v463 = vsel %vm414, %v462, %v421
        %v464 = vrot.slane %v421, 4
        %v465 = vsel %vm414, %v433, %v464
        %v467 = vunpack.c.l.s4 1934713408
        %v468 = vunpack.c.0.s8 %v467
        %v469 = vperm.slane %v463, %v468
        %v471 = vunpack.c.l.s4 1934713408
        %v472 = vunpack.c.0.s8 %v471
        %v473 = vperm.slane %v465, %v472
        %v474 = vrot.slane %v437, 4
        %v475 = vsel %vm414, %v474, %v425
        %v476 = vrot.slane %v425, 4
        %v477 = vsel %vm414, %v437, %v476
        %v479 = vunpack.c.l.s4 1934713408
        %v480 = vunpack.c.0.s8 %v479
        %v481 = vperm.slane %v475, %v480
        %v483 = vunpack.c.l.s4 1934713408
        %v484 = vunpack.c.0.s8 %v483
        %v485 = vperm.slane %v477, %v484
        %v486 = vrot.slane %v457, 4
        %v487 = vsel %vm414, %v486, %v445
        %v488 = vrot.slane %v445, 4
        %v489 = vsel %vm414, %v457, %v488
        %v491 = vunpack.c.l.s4 1934713408
        %v492 = vunpack.c.0.s8 %v491
        %v493 = vperm.slane %v487, %v492
        %v495 = vunpack.c.l.s4 1934713408
        %v496 = vunpack.c.0.s8 %v495
        %v497 = vperm.slane %v489, %v496
        %v498 = vrot.slane %v461, 4
        %v499 = vsel %vm414, %v498, %v449
        %v500 = vrot.slane %v449, 4
        %v501 = vsel %vm414, %v461, %v500
        %v503 = vunpack.c.l.s4 1934713408
        %v504 = vunpack.c.0.s8 %v503
        %v505 = vperm.slane %v499, %v504
        %v507 = vunpack.c.l.s4 1934713408
        %v508 = vunpack.c.0.s8 %v507
        %v509 = vperm.slane %v501, %v508
        %v510 = vrot.slane %v493, 4
        %v511 = vsel %vm414, %v510, %v469
        %v512 = vrot.slane %v469, 4
        %v513 = vsel %vm414, %v493, %v512
        %v514 = vrot.slane %v497, 4
        %v515 = vsel %vm414, %v514, %v473
        %v516 = vrot.slane %v473, 4
        %v517 = vsel %vm414, %v497, %v516
        %v518 = vrot.slane %v505, 4
        %v519 = vsel %vm414, %v518, %v481
        %v520 = vrot.slane %v481, 4
        %v521 = vsel %vm414, %v505, %v520
        %v522 = vrot.slane %v509, 4
        %v523 = vsel %vm414, %v522, %v485
        %v524 = vrot.slane %v485, 4
        %v525 = vsel %vm414, %v509, %v524
        %v526 = vrot.slane %v396, 4
        %v527 = vsel %vm414, %v526, %v390
        %v528 = vrot.slane %v390, 4
        %v529 = vsel %vm414, %v396, %v528
        %v531 = vunpack.c.l.s4 1983009808
        %v532 = vunpack.c.0.s8 %v531
        %v533 = vperm.slane %v527, %v532
        %v535 = vunpack.c.l.s4 1983009808
        %v536 = vunpack.c.0.s8 %v535
        %v537 = vperm.slane %v529, %v536
        %v538 = vrot.slane %v399, 4
        %v539 = vsel %vm414, %v538, %v393
        %v540 = vrot.slane %v393, 4
        %v541 = vsel %vm414, %v399, %v540
        %v543 = vunpack.c.l.s4 1983009808
        %v544 = vunpack.c.0.s8 %v543
        %v545 = vperm.slane %v539, %v544
        %v547 = vunpack.c.l.s4 1983009808
        %v548 = vunpack.c.0.s8 %v547
        %v549 = vperm.slane %v541, %v548
        %v550 = vrot.slane %v408, 4
        %v551 = vsel %vm414, %v550, %v402
        %v552 = vrot.slane %v402, 4
        %v553 = vsel %vm414, %v408, %v552
        %v555 = vunpack.c.l.s4 1983009808
        %v556 = vunpack.c.0.s8 %v555
        %v557 = vperm.slane %v551, %v556
        %v559 = vunpack.c.l.s4 1983009808
        %v560 = vunpack.c.0.s8 %v559
        %v561 = vperm.slane %v553, %v560
        %v562 = vrot.slane %v411, 4
        %v563 = vsel %vm414, %v562, %v405
        %v564 = vrot.slane %v405, 4
        %v565 = vsel %vm414, %v411, %v564
        %v567 = vunpack.c.l.s4 1983009808
        %v568 = vunpack.c.0.s8 %v567
        %v569 = vperm.slane %v563, %v568
        %v571 = vunpack.c.l.s4 1983009808
        %v572 = vunpack.c.0.s8 %v571
        %v573 = vperm.slane %v565, %v572
        %v574 = vrot.slane %v545, 4
        %v575 = vsel %vm414, %v574, %v533
        %v576 = vrot.slane %v533, 4
        %v577 = vsel %vm414, %v545, %v576
        %v579 = vunpack.c.l.s4 1934713408
        %v580 = vunpack.c.0.s8 %v579
        %v581 = vperm.slane %v575, %v580
        %v583 = vunpack.c.l.s4 1934713408
        %v584 = vunpack.c.0.s8 %v583
        %v585 = vperm.slane %v577, %v584
        %v586 = vrot.slane %v549, 4
        %v587 = vsel %vm414, %v586, %v537
        %v588 = vrot.slane %v537, 4
        %v589 = vsel %vm414, %v549, %v588
        %v591 = vunpack.c.l.s4 1934713408
        %v592 = vunpack.c.0.s8 %v591
        %v593 = vperm.slane %v587, %v592
        %v595 = vunpack.c.l.s4 1934713408
        %v596 = vunpack.c.0.s8 %v595
        %v597 = vperm.slane %v589, %v596
        %v598 = vrot.slane %v569, 4
        %v599 = vsel %vm414, %v598, %v557
        %v600 = vrot.slane %v557, 4
        %v601 = vsel %vm414, %v569, %v600
        %v603 = vunpack.c.l.s4 1934713408
        %v604 = vunpack.c.0.s8 %v603
        %v605 = vperm.slane %v599, %v604
        %v607 = vunpack.c.l.s4 1934713408
        %v608 = vunpack.c.0.s8 %v607
        %v609 = vperm.slane %v601, %v608
        %v610 = vrot.slane %v573, 4
        %v611 = vsel %vm414, %v610, %v561
        %v612 = vrot.slane %v561, 4
        %v613 = vsel %vm414, %v573, %v612
        %v615 = vunpack.c.l.s4 1934713408
        %v616 = vunpack.c.0.s8 %v615
        %v617 = vperm.slane %v611, %v616
        %v619 = vunpack.c.l.s4 1934713408
        %v620 = vunpack.c.0.s8 %v619
        %v621 = vperm.slane %v613, %v620
        %v622 = vrot.slane %v605, 4
        %v623 = vsel %vm414, %v622, %v581
        %v624 = vrot.slane %v581, 4
        %v625 = vsel %vm414, %v605, %v624
        %v626 = vrot.slane %v609, 4
        %v627 = vsel %vm414, %v626, %v585
        %v628 = vrot.slane %v585, 4
        %v629 = vsel %vm414, %v609, %v628
        %v630 = vrot.slane %v617, 4
        %v631 = vsel %vm414, %v630, %v593
        %v632 = vrot.slane %v593, 4
        %v633 = vsel %vm414, %v617, %v632
        %v634 = vrot.slane %v621, 4
        %v635 = vsel %vm414, %v634, %v597
        %v636 = vrot.slane %v597, 4
        %v637 = vsel %vm414, %v621, %v636
        %v638 = vld [vmem:[%s3] sm:$0x1]
        %640 = vset.pattern.permute.xlu0 0
        %641 = vperm.xlu0 %640, %v511
        %v642 = vpop.permute.xlu0 %641
        %645 = vset.pattern.permute.xlu0 0
        %646 = vperm.xlu0 %645, %v623
        %v647 = vpop.permute.xlu0 %646
        %650 = vset.pattern.permute.xlu0 0
        %651 = vperm.xlu0 %650, %v513
        %v652 = vpop.permute.xlu0 %651
        %655 = vset.pattern.permute.xlu0 0
        %656 = vperm.xlu0 %655, %v625
        %v657 = vpop.permute.xlu0 %656
        %660 = vset.pattern.permute.xlu0 0
        %661 = vperm.xlu0 %660, %v515
        %v662 = vpop.permute.xlu0 %661
        %665 = vset.pattern.permute.xlu0 0
        %666 = vperm.xlu0 %665, %v627
        %v667 = vpop.permute.xlu0 %666
        %670 = vset.pattern.permute.xlu0 0
        %671 = vperm.xlu0 %670, %v517
        %v672 = vpop.permute.xlu0 %671
        %675 = vset.pattern.permute.xlu0 0
        %676 = vperm.xlu0 %675, %v629
        %v677 = vpop.permute.xlu0 %676
        %680 = vset.pattern.permute.xlu0 0
        %681 = vperm.xlu0 %680, %v519
        %v682 = vpop.permute.xlu0 %681
        %685 = vset.pattern.permute.xlu0 0
        %686 = vperm.xlu0 %685, %v631
        %v687 = vpop.permute.xlu0 %686
        %690 = vset.pattern.permute.xlu0 0
        %691 = vperm.xlu0 %690, %v521
        %v692 = vpop.permute.xlu0 %691
        %695 = vset.pattern.permute.xlu0 0
        %696 = vperm.xlu0 %695, %v633
        %v697 = vpop.permute.xlu0 %696
        %700 = vset.pattern.permute.xlu0 0
        %701 = vperm.xlu0 %700, %v523
        %v702 = vpop.permute.xlu0 %701
        %705 = vset.pattern.permute.xlu0 0
        %706 = vperm.xlu0 %705, %v635
        %v707 = vpop.permute.xlu0 %706
        %710 = vset.pattern.permute.xlu0 0
        %711 = vperm.xlu0 %710, %v525
        %v712 = vpop.permute.xlu0 %711
        %715 = vset.pattern.permute.xlu0 0
        %716 = vperm.xlu0 %715, %v637
        %v717 = vpop.permute.xlu0 %716
        %v719 = vperm.slane %v638, 0
        %v720 = vmul.f32 %v642, %v719
        %v721 = vmul.f32 %v647, %v719
        %v722 = vmul.f32 %v652, %v719
        %v723 = vmul.f32 %v657, %v719
        %v724 = vmul.f32 %v662, %v719
        %v725 = vmul.f32 %v667, %v719
        %v726 = vmul.f32 %v672, %v719
        %v727 = vmul.f32 %v677, %v719
        %v728 = vmul.f32 %v682, %v719
        %v729 = vmul.f32 %v687, %v719
        %v730 = vmul.f32 %v692, %v719
        %v731 = vmul.f32 %v697, %v719
        %v732 = vmul.f32 %v702, %v719
        %v733 = vmul.f32 %v707, %v719
        %v734 = vmul.f32 %v712, %v719
        %v735 = vmul.f32 %v717, %v719
        %v736 = vadd.f32 %v720, 0.0
        %v737 = vadd.f32 %v721, 0.0
        %v738 = vadd.f32 %v722, 0.0
        %v739 = vadd.f32 %v723, 0.0
        %v740 = vadd.f32 %v724, 0.0
        %v741 = vadd.f32 %v725, 0.0
        %v742 = vadd.f32 %v726, 0.0
        %v743 = vadd.f32 %v727, 0.0
        %v744 = vadd.f32 %v728, 0.0
        %v745 = vadd.f32 %v729, 0.0
        %v746 = vadd.f32 %v730, 0.0
        %v747 = vadd.f32 %v731, 0.0
        %v748 = vadd.f32 %v732, 0.0
        %v749 = vadd.f32 %v733, 0.0
        %v750 = vadd.f32 %v734, 0.0
        %v751 = vadd.f32 %v735, 0.0
        %v752 = vld [vmem:[%s3 + $0x1] sm:$0x1]
        %753 = vset.pattern.permute.xlu0 1
        %754 = vperm.xlu0 %753, %v511
        %v755 = vpop.permute.xlu0 %754
        %757 = vset.pattern.permute.xlu0 1
        %758 = vperm.xlu0 %757, %v623
        %v759 = vpop.permute.xlu0 %758
        %761 = vset.pattern.permute.xlu0 1
        %762 = vperm.xlu0 %761, %v513
        %v763 = vpop.permute.xlu0 %762
        %765 = vset.pattern.permute.xlu0 1
        %766 = vperm.xlu0 %765, %v625
        %v767 = vpop.permute.xlu0 %766
        %769 = vset.pattern.permute.xlu0 1
        %770 = vperm.xlu0 %769, %v515
        %v771 = vpop.permute.xlu0 %770
        %773 = vset.pattern.permute.xlu0 1
        %774 = vperm.xlu0 %773, %v627
        %v775 = vpop.permute.xlu0 %774
        %777 = vset.pattern.permute.xlu0 1
        %778 = vperm.xlu0 %777, %v517
        %v779 = vpop.permute.xlu0 %778
        %781 = vset.pattern.permute.xlu0 1
        %782 = vperm.xlu0 %781, %v629
        %v783 = vpop.permute.xlu0 %782
        %785 = vset.pattern.permute.xlu0 1
        %786 = vperm.xlu0 %785, %v519
        %v787 = vpop.permute.xlu0 %786
        %789 = vset.pattern.permute.xlu0 1
        %790 = vperm.xlu0 %789, %v631
        %v791 = vpop.permute.xlu0 %790
        %793 = vset.pattern.permute.xlu0 1
        %794 = vperm.xlu0 %793, %v521
        %v795 = vpop.permute.xlu0 %794
        %797 = vset.pattern.permute.xlu0 1
        %798 = vperm.xlu0 %797, %v633
        %v799 = vpop.permute.xlu0 %798
        %801 = vset.pattern.permute.xlu0 1
        %802 = vperm.xlu0 %801, %v523
        %v803 = vpop.permute.xlu0 %802
        %805 = vset.pattern.permute.xlu0 1
        %806 = vperm.xlu0 %805, %v635
        %v807 = vpop.permute.xlu0 %806
        %809 = vset.pattern.permute.xlu0 1
        %810 = vperm.xlu0 %809, %v525
        %v811 = vpop.permute.xlu0 %810
        %813 = vset.pattern.permute.xlu0 1
        %814 = vperm.xlu0 %813, %v637
        %v815 = vpop.permute.xlu0 %814
        %v817 = vperm.slane %v752, 0
        %v818 = vmul.f32 %v755, %v817
        %v819 = vmul.f32 %v759, %v817
        %v820 = vmul.f32 %v763, %v817
        %v821 = vmul.f32 %v767, %v817
        %v822 = vmul.f32 %v771, %v817
        %v823 = vmul.f32 %v775, %v817
        %v824 = vmul.f32 %v779, %v817
        %v825 = vmul.f32 %v783, %v817
        %v826 = vmul.f32 %v787, %v817
        %v827 = vmul.f32 %v791, %v817
        %v828 = vmul.f32 %v795, %v817
        %v829 = vmul.f32 %v799, %v817
        %v830 = vmul.f32 %v803, %v817
        %v831 = vmul.f32 %v807, %v817
        %v832 = vmul.f32 %v811, %v817
        %v833 = vmul.f32 %v815, %v817
        %v834 = vadd.f32 %v736, %v818
        %v835 = vadd.f32 %v737, %v819
        %v836 = vadd.f32 %v738, %v820
        %v837 = vadd.f32 %v739, %v821
        %v838 = vadd.f32 %v740, %v822
        %v839 = vadd.f32 %v741, %v823
        %v840 = vadd.f32 %v742, %v824
        %v841 = vadd.f32 %v743, %v825
        %v842 = vadd.f32 %v744, %v826
        %v843 = vadd.f32 %v745, %v827
        %v844 = vadd.f32 %v746, %v828
        %v845 = vadd.f32 %v747, %v829
        %v846 = vadd.f32 %v748, %v830
        %v847 = vadd.f32 %v749, %v831
        %v848 = vadd.f32 %v750, %v832
        %v849 = vadd.f32 %v751, %v833
        %v850 = vld [vmem:[%s3 + $0x2] sm:$0x1]
        %851 = vset.pattern.permute.xlu0 2
        %852 = vperm.xlu0 %851, %v511
        %v853 = vpop.permute.xlu0 %852
        %855 = vset.pattern.permute.xlu0 2
        %856 = vperm.xlu0 %855, %v623
        %v857 = vpop.permute.xlu0 %856
        %859 = vset.pattern.permute.xlu0 2
        %860 = vperm.xlu0 %859, %v513
        %v861 = vpop.permute.xlu0 %860
        %863 = vset.pattern.permute.xlu0 2
        %864 = vperm.xlu0 %863, %v625
        %v865 = vpop.permute.xlu0 %864
        %867 = vset.pattern.permute.xlu0 2
        %868 = vperm.xlu0 %867, %v515
        %v869 = vpop.permute.xlu0 %868
        %871 = vset.pattern.permute.xlu0 2
        %872 = vperm.xlu0 %871, %v627
        %v873 = vpop.permute.xlu0 %872
        %875 = vset.pattern.permute.xlu0 2
        %876 = vperm.xlu0 %875, %v517
        %v877 = vpop.permute.xlu0 %876
        %879 = vset.pattern.permute.xlu0 2
        %880 = vperm.xlu0 %879, %v629
        %v881 = vpop.permute.xlu0 %880
        %883 = vset.pattern.permute.xlu0 2
        %884 = vperm.xlu0 %883, %v519
        %v885 = vpop.permute.xlu0 %884
        %887 = vset.pattern.permute.xlu0 2
        %888 = vperm.xlu0 %887, %v631
        %v889 = vpop.permute.xlu0 %888
        %891 = vset.pattern.permute.xlu0 2
        %892 = vperm.xlu0 %891, %v521
        %v893 = vpop.permute.xlu0 %892
        %895 = vset.pattern.permute.xlu0 2
        %896 = vperm.xlu0 %895, %v633
        %v897 = vpop.permute.xlu0 %896
        %899 = vset.pattern.permute.xlu0 2
        %900 = vperm.xlu0 %899, %v523
        %v901 = vpop.permute.xlu0 %900
        %903 = vset.pattern.permute.xlu0 2
        %904 = vperm.xlu0 %903, %v635
        %v905 = vpop.permute.xlu0 %904
        %907 = vset.pattern.permute.xlu0 2
        %908 = vperm.xlu0 %907, %v525
        %v909 = vpop.permute.xlu0 %908
        %911 = vset.pattern.permute.xlu0 2
        %912 = vperm.xlu0 %911, %v637
        %v913 = vpop.permute.xlu0 %912
        %v915 = vperm.slane %v850, 0
        %v916 = vmul.f32 %v853, %v915
        %v917 = vmul.f32 %v857, %v915
        %v918 = vmul.f32 %v861, %v915
        %v919 = vmul.f32 %v865, %v915
        %v920 = vmul.f32 %v869, %v915
        %v921 = vmul.f32 %v873, %v915
        %v922 = vmul.f32 %v877, %v915
        %v923 = vmul.f32 %v881, %v915
        %v924 = vmul.f32 %v885, %v915
        %v925 = vmul.f32 %v889, %v915
        %v926 = vmul.f32 %v893, %v915
        %v927 = vmul.f32 %v897, %v915
        %v928 = vmul.f32 %v901, %v915
        %v929 = vmul.f32 %v905, %v915
        %v930 = vmul.f32 %v909, %v915
        %v931 = vmul.f32 %v913, %v915
        %v932 = vadd.f32 %v834, %v916
        %v933 = vadd.f32 %v835, %v917
        %v934 = vadd.f32 %v836, %v918
        %v935 = vadd.f32 %v837, %v919
        %v936 = vadd.f32 %v838, %v920
        %v937 = vadd.f32 %v839, %v921
        %v938 = vadd.f32 %v840, %v922
        %v939 = vadd.f32 %v841, %v923
        %v940 = vadd.f32 %v842, %v924
        %v941 = vadd.f32 %v843, %v925
        %v942 = vadd.f32 %v844, %v926
        %v943 = vadd.f32 %v845, %v927
        %v944 = vadd.f32 %v846, %v928
        %v945 = vadd.f32 %v847, %v929
        %v946 = vadd.f32 %v848, %v930
        %v947 = vadd.f32 %v849, %v931
        %v948 = vld [vmem:[%s3 + $0x3] sm:$0x1]
        %949 = vset.pattern.permute.xlu0 3
        %950 = vperm.xlu0 %949, %v511
        %v951 = vpop.permute.xlu0 %950
        %953 = vset.pattern.permute.xlu0 3
        %954 = vperm.xlu0 %953, %v623
        %v955 = vpop.permute.xlu0 %954
        %957 = vset.pattern.permute.xlu0 3
        %958 = vperm.xlu0 %957, %v513
        %v959 = vpop.permute.xlu0 %958
        %961 = vset.pattern.permute.xlu0 3
        %962 = vperm.xlu0 %961, %v625
        %v963 = vpop.permute.xlu0 %962
        %965 = vset.pattern.permute.xlu0 3
        %966 = vperm.xlu0 %965, %v515
        %v967 = vpop.permute.xlu0 %966
        %969 = vset.pattern.permute.xlu0 3
        %970 = vperm.xlu0 %969, %v627
        %v971 = vpop.permute.xlu0 %970
        %973 = vset.pattern.permute.xlu0 3
        %974 = vperm.xlu0 %973, %v517
        %v975 = vpop.permute.xlu0 %974
        %977 = vset.pattern.permute.xlu0 3
        %978 = vperm.xlu0 %977, %v629
        %v979 = vpop.permute.xlu0 %978
        %981 = vset.pattern.permute.xlu0 3
        %982 = vperm.xlu0 %981, %v519
        %v983 = vpop.permute.xlu0 %982
        %985 = vset.pattern.permute.xlu0 3
        %986 = vperm.xlu0 %985, %v631
        %v987 = vpop.permute.xlu0 %986
        %989 = vset.pattern.permute.xlu0 3
        %990 = vperm.xlu0 %989, %v521
        %v991 = vpop.permute.xlu0 %990
        %993 = vset.pattern.permute.xlu0 3
        %994 = vperm.xlu0 %993, %v633
        %v995 = vpop.permute.xlu0 %994
        %997 = vset.pattern.permute.xlu0 3
        %998 = vperm.xlu0 %997, %v523
        %v999 = vpop.permute.xlu0 %998
        %1001 = vset.pattern.permute.xlu0 3
        %1002 = vperm.xlu0 %1001, %v635
        %v1003 = vpop.permute.xlu0 %1002
        %1005 = vset.pattern.permute.xlu0 3
        %1006 = vperm.xlu0 %1005, %v525
        %v1007 = vpop.permute.xlu0 %1006
        %1009 = vset.pattern.permute.xlu0 3
        %1010 = vperm.xlu0 %1009, %v637
        %v1011 = vpop.permute.xlu0 %1010
        %v1013 = vperm.slane %v948, 0
        %v1014 = vmul.f32 %v951, %v1013
        %v1015 = vmul.f32 %v955, %v1013
        %v1016 = vmul.f32 %v959, %v1013
        %v1017 = vmul.f32 %v963, %v1013
        %v1018 = vmul.f32 %v967, %v1013
        %v1019 = vmul.f32 %v971, %v1013
        %v1020 = vmul.f32 %v975, %v1013
        %v1021 = vmul.f32 %v979, %v1013
        %v1022 = vmul.f32 %v983, %v1013
        %v1023 = vmul.f32 %v987, %v1013
        %v1024 = vmul.f32 %v991, %v1013
        %v1025 = vmul.f32 %v995, %v1013
        %v1026 = vmul.f32 %v999, %v1013
        %v1027 = vmul.f32 %v1003, %v1013
        %v1028 = vmul.f32 %v1007, %v1013
        %v1029 = vmul.f32 %v1011, %v1013
        %v1030 = vadd.f32 %v932, %v1014
        %v1031 = vadd.f32 %v933, %v1015
        %v1032 = vadd.f32 %v934, %v1016
        %v1033 = vadd.f32 %v935, %v1017
        %v1034 = vadd.f32 %v936, %v1018
        %v1035 = vadd.f32 %v937, %v1019
        %v1036 = vadd.f32 %v938, %v1020
        %v1037 = vadd.f32 %v939, %v1021
        %v1038 = vadd.f32 %v940, %v1022
        %v1039 = vadd.f32 %v941, %v1023
        %v1040 = vadd.f32 %v942, %v1024
        %v1041 = vadd.f32 %v943, %v1025
        %v1042 = vadd.f32 %v944, %v1026
        %v1043 = vadd.f32 %v945, %v1027
        %v1044 = vadd.f32 %v946, %v1028
        %v1045 = vadd.f32 %v947, %v1029
        %v1046 = vld [vmem:[%s4] sm:$0x1]
        %v1048 = vperm.slane %v1046, 0
        %v1050 = vadd.f32 %v1030, %v1048
        %v1051 = vadd.f32 %v1031, %v1048
        %v1052 = vadd.f32 %v1032, %v1048
        %v1053 = vadd.f32 %v1033, %v1048
        %v1054 = vadd.f32 %v1034, %v1048
        %v1055 = vadd.f32 %v1035, %v1048
        %v1056 = vadd.f32 %v1036, %v1048
        %v1057 = vadd.f32 %v1037, %v1048
        %v1058 = vadd.f32 %v1038, %v1048
        %v1059 = vadd.f32 %v1039, %v1048
        %v1060 = vadd.f32 %v1040, %v1048
        %v1061 = vadd.f32 %v1041, %v1048
        %v1062 = vadd.f32 %v1042, %v1048
        %v1063 = vadd.f32 %v1043, %v1048
        %v1064 = vadd.f32 %v1044, %v1048
        %v1065 = vadd.f32 %v1045, %v1048
        %v1066 = vmax.f32 %v1050, 0.0
        %v1067 = vmax.f32 %v1051, 0.0
        %v1068 = vmax.f32 %v1052, 0.0
        %v1069 = vmax.f32 %v1053, 0.0
        %v1070 = vmax.f32 %v1054, 0.0
        %v1071 = vmax.f32 %v1055, 0.0
        %v1072 = vmax.f32 %v1056, 0.0
        %v1073 = vmax.f32 %v1057, 0.0
        %v1074 = vmax.f32 %v1058, 0.0
        %v1075 = vmax.f32 %v1059, 0.0
        %v1076 = vmax.f32 %v1060, 0.0
        %v1077 = vmax.f32 %v1061, 0.0
        %v1078 = vmax.f32 %v1062, 0.0
        %v1079 = vmax.f32 %v1063, 0.0
        %v1080 = vmax.f32 %v1064, 0.0
        %v1081 = vmax.f32 %v1065, 0.0
        %v1082 = vrot.slane %v1070, 4
        %v1083 = vsel %vm414, %v1082, %v1066
        %v1084 = vrot.slane %v1066, 4
        %v1085 = vsel %vm414, %v1070, %v1084
        %v1087 = vunpack.c.l.s4 1983009808
        %v1088 = vunpack.c.0.s8 %v1087
        %v1089 = vperm.slane %v1083, %v1088
        %v1091 = vunpack.c.l.s4 1983009808
        %v1092 = vunpack.c.0.s8 %v1091
        %v1093 = vperm.slane %v1085, %v1092
        %v1094 = vrot.slane %v1072, 4
        %v1095 = vsel %vm414, %v1094, %v1068
        %v1096 = vrot.slane %v1068, 4
        %v1097 = vsel %vm414, %v1072, %v1096
        %v1099 = vunpack.c.l.s4 1983009808
        %v1100 = vunpack.c.0.s8 %v1099
        %v1101 = vperm.slane %v1095, %v1100
        %v1103 = vunpack.c.l.s4 1983009808
        %v1104 = vunpack.c.0.s8 %v1103
        %v1105 = vperm.slane %v1097, %v1104
        %v1106 = vrot.slane %v1078, 4
        %v1107 = vsel %vm414, %v1106, %v1074
        %v1108 = vrot.slane %v1074, 4
        %v1109 = vsel %vm414, %v1078, %v1108
        %v1111 = vunpack.c.l.s4 1983009808
        %v1112 = vunpack.c.0.s8 %v1111
        %v1113 = vperm.slane %v1107, %v1112
        %v1115 = vunpack.c.l.s4 1983009808
        %v1116 = vunpack.c.0.s8 %v1115
        %v1117 = vperm.slane %v1109, %v1116
        %v1118 = vrot.slane %v1080, 4
        %v1119 = vsel %vm414, %v1118, %v1076
        %v1120 = vrot.slane %v1076, 4
        %v1121 = vsel %vm414, %v1080, %v1120
        %v1123 = vunpack.c.l.s4 1983009808
        %v1124 = vunpack.c.0.s8 %v1123
        %v1125 = vperm.slane %v1119, %v1124
        %v1127 = vunpack.c.l.s4 1983009808
        %v1128 = vunpack.c.0.s8 %v1127
        %v1129 = vperm.slane %v1121, %v1128
        %v1130 = vrot.slane %v1101, 4
        %v1131 = vsel %vm414, %v1130, %v1089
        %v1132 = vrot.slane %v1089, 4
        %v1133 = vsel %vm414, %v1101, %v1132
        %v1135 = vunpack.c.l.s4 1934713408
        %v1136 = vunpack.c.0.s8 %v1135
        %v1137 = vperm.slane %v1131, %v1136
        %v1139 = vunpack.c.l.s4 1934713408
        %v1140 = vunpack.c.0.s8 %v1139
        %v1141 = vperm.slane %v1133, %v1140
        %v1142 = vrot.slane %v1105, 4
        %v1143 = vsel %vm414, %v1142, %v1093
        %v1144 = vrot.slane %v1093, 4
        %v1145 = vsel %vm414, %v1105, %v1144
        %v1147 = vunpack.c.l.s4 1934713408
        %v1148 = vunpack.c.0.s8 %v1147
        %v1149 = vperm.slane %v1143, %v1148
        %v1151 = vunpack.c.l.s4 1934713408
        %v1152 = vunpack.c.0.s8 %v1151
        %v1153 = vperm.slane %v1145, %v1152
        %v1154 = vrot.slane %v1125, 4
        %v1155 = vsel %vm414, %v1154, %v1113
        %v1156 = vrot.slane %v1113, 4
        %v1157 = vsel %vm414, %v1125, %v1156
        %v1159 = vunpack.c.l.s4 1934713408
        %v1160 = vunpack.c.0.s8 %v1159
        %v1161 = vperm.slane %v1155, %v1160
        %v1163 = vunpack.c.l.s4 1934713408
        %v1164 = vunpack.c.0.s8 %v1163
        %v1165 = vperm.slane %v1157, %v1164
        %v1166 = vrot.slane %v1129, 4
        %v1167 = vsel %vm414, %v1166, %v1117
        %v1168 = vrot.slane %v1117, 4
        %v1169 = vsel %vm414, %v1129, %v1168
        %v1171 = vunpack.c.l.s4 1934713408
        %v1172 = vunpack.c.0.s8 %v1171
        %v1173 = vperm.slane %v1167, %v1172
        %v1175 = vunpack.c.l.s4 1934713408
        %v1176 = vunpack.c.0.s8 %v1175
        %v1177 = vperm.slane %v1169, %v1176
        %v1178 = vrot.slane %v1161, 4
        %v1179 = vsel %vm414, %v1178, %v1137
        %v1180 = vrot.slane %v1137, 4
        %v1181 = vsel %vm414, %v1161, %v1180
        %v1182 = vrot.slane %v1165, 4
        %v1183 = vsel %vm414, %v1182, %v1141
        %v1184 = vrot.slane %v1141, 4
        %v1185 = vsel %vm414, %v1165, %v1184
        %v1186 = vrot.slane %v1173, 4
        %v1187 = vsel %vm414, %v1186, %v1149
        %v1188 = vrot.slane %v1149, 4
        %v1189 = vsel %vm414, %v1173, %v1188
        %v1190 = vrot.slane %v1177, 4
        %v1191 = vsel %vm414, %v1190, %v1153
        %v1192 = vrot.slane %v1153, 4
        %v1193 = vsel %vm414, %v1177, %v1192
        %v1194 = vrot.slane %v1071, 4
        %v1195 = vsel %vm414, %v1194, %v1067
        %v1196 = vrot.slane %v1067, 4
        %v1197 = vsel %vm414, %v1071, %v1196
        %v1199 = vunpack.c.l.s4 1983009808
        %v1200 = vunpack.c.0.s8 %v1199
        %v1201 = vperm.slane %v1195, %v1200
        %v1203 = vunpack.c.l.s4 1983009808
        %v1204 = vunpack.c.0.s8 %v1203
        %v1205 = vperm.slane %v1197, %v1204
        %v1206 = vrot.slane %v1073, 4
        %v1207 = vsel %vm414, %v1206, %v1069
        %v1208 = vrot.slane %v1069, 4
        %v1209 = vsel %vm414, %v1073, %v1208
        %v1211 = vunpack.c.l.s4 1983009808
        %v1212 = vunpack.c.0.s8 %v1211
        %v1213 = vperm.slane %v1207, %v1212
        %v1215 = vunpack.c.l.s4 1983009808
        %v1216 = vunpack.c.0.s8 %v1215
        %v1217 = vperm.slane %v1209, %v1216
        %v1218 = vrot.slane %v1079, 4
        %v1219 = vsel %vm414, %v1218, %v1075
        %v1220 = vrot.slane %v1075, 4
        %v1221 = vsel %vm414, %v1079, %v1220
        %v1223 = vunpack.c.l.s4 1983009808
        %v1224 = vunpack.c.0.s8 %v1223
        %v1225 = vperm.slane %v1219, %v1224
        %v1227 = vunpack.c.l.s4 1983009808
        %v1228 = vunpack.c.0.s8 %v1227
        %v1229 = vperm.slane %v1221, %v1228
        %v1230 = vrot.slane %v1081, 4
        %v1231 = vsel %vm414, %v1230, %v1077
        %v1232 = vrot.slane %v1077, 4
        %v1233 = vsel %vm414, %v1081, %v1232
        %v1235 = vunpack.c.l.s4 1983009808
        %v1236 = vunpack.c.0.s8 %v1235
        %v1237 = vperm.slane %v1231, %v1236
        %v1239 = vunpack.c.l.s4 1983009808
        %v1240 = vunpack.c.0.s8 %v1239
        %v1241 = vperm.slane %v1233, %v1240
        %v1242 = vrot.slane %v1213, 4
        %v1243 = vsel %vm414, %v1242, %v1201
        %v1244 = vrot.slane %v1201, 4
        %v1245 = vsel %vm414, %v1213, %v1244
        %v1247 = vunpack.c.l.s4 1934713408
        %v1248 = vunpack.c.0.s8 %v1247
        %v1249 = vperm.slane %v1243, %v1248
        %v1251 = vunpack.c.l.s4 1934713408
        %v1252 = vunpack.c.0.s8 %v1251
        %v1253 = vperm.slane %v1245, %v1252
        %v1254 = vrot.slane %v1217, 4
        %v1255 = vsel %vm414, %v1254, %v1205
        %v1256 = vrot.slane %v1205, 4
        %v1257 = vsel %vm414, %v1217, %v1256
        %v1259 = vunpack.c.l.s4 1934713408
        %v1260 = vunpack.c.0.s8 %v1259
        %v1261 = vperm.slane %v1255, %v1260
        %v1263 = vunpack.c.l.s4 1934713408
        %v1264 = vunpack.c.0.s8 %v1263
        %v1265 = vperm.slane %v1257, %v1264
        %v1266 = vrot.slane %v1237, 4
        %v1267 = vsel %vm414, %v1266, %v1225
        %v1268 = vrot.slane %v1225, 4
        %v1269 = vsel %vm414, %v1237, %v1268
        %v1271 = vunpack.c.l.s4 1934713408
        %v1272 = vunpack.c.0.s8 %v1271
        %v1273 = vperm.slane %v1267, %v1272
        %v1275 = vunpack.c.l.s4 1934713408
        %v1276 = vunpack.c.0.s8 %v1275
        %v1277 = vperm.slane %v1269, %v1276
        %v1278 = vrot.slane %v1241, 4
        %v1279 = vsel %vm414, %v1278, %v1229
        %v1280 = vrot.slane %v1229, 4
        %v1281 = vsel %vm414, %v1241, %v1280
        %v1283 = vunpack.c.l.s4 1934713408
        %v1284 = vunpack.c.0.s8 %v1283
        %v1285 = vperm.slane %v1279, %v1284
        %v1287 = vunpack.c.l.s4 1934713408
        %v1288 = vunpack.c.0.s8 %v1287
        %v1289 = vperm.slane %v1281, %v1288
        %v1290 = vrot.slane %v1273, 4
        %v1291 = vsel %vm414, %v1290, %v1249
        %v1292 = vrot.slane %v1249, 4
        %v1293 = vsel %vm414, %v1273, %v1292
        %v1294 = vrot.slane %v1277, 4
        %v1295 = vsel %vm414, %v1294, %v1253
        %v1296 = vrot.slane %v1253, 4
        %v1297 = vsel %vm414, %v1277, %v1296
        %v1298 = vrot.slane %v1285, 4
        %v1299 = vsel %vm414, %v1298, %v1261
        %v1300 = vrot.slane %v1261, 4
        %v1301 = vsel %vm414, %v1285, %v1300
        %v1302 = vrot.slane %v1289, 4
        %v1303 = vsel %vm414, %v1302, %v1265
        %v1304 = vrot.slane %v1265, 4
        %v1305 = vsel %vm414, %v1289, %v1304
        %1307 = vrot.lane.b32.xlu0 %v1181, 8
        %v1308 = vpop.permute.xlu0 %1307
        %1311 = vrot.lane.b32.xlu0 %v1183, 16
        %v1312 = vpop.permute.xlu0 %1311
        %1315 = vrot.lane.b32.xlu0 %v1185, 24
        %v1316 = vpop.permute.xlu0 %1315
        %1319 = vrot.lane.b32.xlu0 %v1187, 32
        %v1320 = vpop.permute.xlu0 %1319
        %1323 = vrot.lane.b32.xlu0 %v1189, 40
        %v1324 = vpop.permute.xlu0 %1323
        %1327 = vrot.lane.b32.xlu0 %v1191, 48
        %v1328 = vpop.permute.xlu0 %1327
        %1331 = vrot.lane.b32.xlu0 %v1193, 56
        %v1332 = vpop.permute.xlu0 %1331
        %1335 = vrot.lane.b32.xlu0 %v1291, 64
        %v1336 = vpop.permute.xlu0 %1335
        %1339 = vrot.lane.b32.xlu0 %v1293, 72
        %v1340 = vpop.permute.xlu0 %1339
        %1343 = vrot.lane.b32.xlu0 %v1295, 80
        %v1344 = vpop.permute.xlu0 %1343
        %1347 = vrot.lane.b32.xlu0 %v1297, 88
        %v1348 = vpop.permute.xlu0 %1347
        %1351 = vrot.lane.b32.xlu0 %v1299, 96
        %v1352 = vpop.permute.xlu0 %1351
        %1355 = vrot.lane.b32.xlu0 %v1301, 104
        %v1356 = vpop.permute.xlu0 %1355
        %1359 = vrot.lane.b32.xlu0 %v1303, 112
        %v1360 = vpop.permute.xlu0 %1359
        %1363 = vrot.lane.b32.xlu0 %v1305, 120
        %v1364 = vpop.permute.xlu0 %1363
        %vm1366 = vcmask 64512
        %v1367 = vsel %vm1366, %v1179, %v1308
        %vm1368 = vcmask 130048
        %v1369 = vsel %vm1368, %v1367, %v1312
        %vm1370 = vcmask 195584
        %v1371 = vsel %vm1370, %v1369, %v1316
        %vm1372 = vcmask 261120
        %v1373 = vsel %vm1372, %v1371, %v1320
        %vm1374 = vcmask 326656
        %v1375 = vsel %vm1374, %v1373, %v1324
        %vm1376 = vcmask 392192
        %v1377 = vsel %vm1376, %v1375, %v1328
        %vm1378 = vcmask 457728
        %v1379 = vsel %vm1378, %v1377, %v1332
        %vm1380 = vcmask 523264
        %v1381 = vsel %vm1380, %v1379, %v1336
        %vm1382 = vcmask 588800
        %v1383 = vsel %vm1382, %v1381, %v1340
        %vm1384 = vcmask 654336
        %v1385 = vsel %vm1384, %v1383, %v1344
        %vm1386 = vcmask 719872
        %v1387 = vsel %vm1386, %v1385, %v1348
        %vm1388 = vcmask 785408
        %v1389 = vsel %vm1388, %v1387, %v1352
        %vm1390 = vcmask 850944
        %v1391 = vsel %vm1390, %v1389, %v1356
        %vm1392 = vcmask 916480
        %v1393 = vsel %vm1392, %v1391, %v1360
        %vm1394 = vcmask 982016
        %v1395 = vsel %vm1394, %v1393, %v1364
        %1396 = vst [vmem:[%s231] sm:$0xff] %v1395
        %s1397 = sand.u32 %s151, 1
        %s1398 = scalar_lea.sflag [#allocation3], %s1397
        %s1399 = sand.u32 %s151, 1
        %s1400 = smul.addr %s1399, 8
        %s1401 = scalar_lea.vmem [#allocation2], %s1400
        // Predicated region
        $region41: #{tpu_custom_call.1} parent=39 // pred_check
          %p1402 = pneg %p161
        $region42: #{tpu_custom_call.1} parent=39 // pred_check_branch
          %1404 = sbr.rel (%p1402) target = $region44
        $region43: #{tpu_custom_call.1} parent=39 // pred_region
          %1406 = vsyncadd %s1398, 0
          %s1407 = smul.addr %s23, 2
          %s1408 = sadd.s32 %s24, %s1407
          %s1409 = smul.addr %s1408, 8
          %s1410 = scalar_lea.hbm %s5, %s1409
          %s1412 = sshll.u32 %s1401, 4
          %s1413 = int_to_ptr.vmem [resolvable:$true] %s1412
          %s1414 = sshll.u32 %s1410, 4
          %s1415 = int_to_ptr.hbm [resolvable:$true] %s1414
          %1417 = dma.vmem_to_hbm [thread:$0]  %s1413, 128, %s1415, %s1398
        $region44: #{tpu_custom_call.1} parent=39 // pred_fallthru
          _
      $region40: #{tpu_custom_call.1} parent=5 // pred_fallthru
        _
      %p1418 = scmp.le.s32.totalorder 2, %s14
      // Predicated region
      $region45: #{tpu_custom_call.1} parent=5 // pred_check
        %p1419 = pneg %p1418
      $region46: #{tpu_custom_call.1} parent=5 // pred_check_branch
        %1421 = sbr.rel (%p1419) target = $region48
      $region47: #{tpu_custom_call.1} parent=5 // pred_region
        %s1422 = ssub.s32 %s14, 2
        // Predicated region
        $region49: #{tpu_custom_call.1} parent=47 // pred_check
          %p1423 = pneg %p167
        $region50: #{tpu_custom_call.1} parent=47 // pred_check_branch
          %1425 = sbr.rel (%p1423) target = $region52
        $region51: #{tpu_custom_call.1} parent=47 // pred_region
          %s1426 = sand.u32 %s152, 1
          %s1427 = scalar_lea.sflag [#allocation3], %s1426
          %s1428 = sand.u32 %s152, 1
          %s1429 = smul.addr %s1428, 8
          %s1430 = scalar_lea.vmem [#allocation2], %s1429
          %1432 = dma.done %s1427, 128
        $region52: #{tpu_custom_call.1} parent=47 // pred_fallthru
          _
      $region48: #{tpu_custom_call.1} parent=5 // pred_fallthru
        _
    $region6: #{tpu_custom_call.1} parent=1 // loop_footer
      %s18 = sadd.s32 1, %s14
    $region7: #{tpu_custom_call.1} parent=1 // loop_footer_branch
      %13 = sbr.rel target = $region3
    $region8: #{tpu_custom_call.1} parent=1 // loop_exit
      _
    %1433 = vsyncpa [#allocation3], 1
    %s1434 = scalar_lea.sflag [#allocation3], 1
    %1435 = vsyncpa %s1434, 1

</llo_original>
